<compile_context>
chip_gen: v7x
topology: tpu7x:2x2x1
jax: 0.10.0
libtpu: 0.0.40
codegen_flags: <defaults>
</compile_context>

<pallas_src>
import functools

import jax
import jax.numpy as jnp
from jax import lax
from jax.experimental import pallas as pl
from jax.experimental.pallas import tpu as pltpu


def _round_up(a, b):
    return -(-a // b) * b


def _cdiv(a, b):
    return -(-a // b)


def _hw_info():
    """(vmem_capacity_bytes, num_tensorcores, is_v5) with safe fallbacks."""
    kind = ""
    try:
        kind = jax.local_devices()[0].device_kind.lower()
    except Exception:
        pass
    vmem_bytes = None
    num_cores = None
    try:
        info = pltpu.get_tpu_info()
        v = getattr(info, "vmem_capacity_bytes", None)
        if v:
            vmem_bytes = int(v)
        for attr in ("num_cores", "num_tensorcores", "tensorcore_count",
                     "cores_per_chip"):
            c = getattr(info, attr, None)
            if c:
                num_cores = int(c)
                break
    except Exception:
        pass
    is_v7 = "7" in kind
    is_v5 = "v5" in kind
    if vmem_bytes is None or vmem_bytes <= 0:
        # v5e/v6e: 128 MiB physical VMEM; v7x (and unknown): conservative 64 MiB.
        vmem_bytes = (128 << 20) if (is_v5 or "v6" in kind) else (64 << 20)
    if num_cores is None or num_cores <= 0:
        num_cores = 2 if is_v7 else 1
    return vmem_bytes, num_cores, is_v5


_SQRT_HALF = 0.7071067811865476


def _gelu(h, approximate):
    if approximate:
        # tanh form -> transcendental routed to the EUP slot (free vs. VALU).
        return jax.nn.gelu(h, approximate=True)
    # exact erf form (matches torch.nn.GELU() default).
    return 0.5 * h * (1.0 + lax.erf(h * jnp.float32(_SQRT_HALF)))


# ----------------------------------------------------------------------------
# Kernels
# ----------------------------------------------------------------------------
def _ff_fused_kernel(x_ref, g_ref, beta_ref, w1_ref, b1_ref, w2_ref, b2_ref,
                     o_ref, *, eps, approximate_gelu):
    """Weight-resident path: whole FFN for one row tile in a single grid step."""
    x = x_ref[...].astype(jnp.float32)
    mean = jnp.mean(x, axis=-1, keepdims=True)
    centered = x - mean
    var = jnp.mean(centered * centered, axis=-1, keepdims=True)  # biased (torch LN)
    xn = centered * lax.rsqrt(var + eps)
    xn = (xn * g_ref[...] + beta_ref[...]).astype(w1_ref.dtype)
    h = jnp.dot(xn, w1_ref[...], preferred_element_type=jnp.float32) + b1_ref[...]
    h = _gelu(h, approximate_gelu)
    out = jnp.dot(h.astype(w2_ref.dtype), w2_ref[...],
                  preferred_element_type=jnp.float32) + b2_ref[...]
    o_ref[...] = out.astype(o_ref.dtype)


def _ff_stream_kernel(x_ref, g_ref, beta_ref, w1_ref, b1_ref, w2_ref, b2_ref,
                      o_ref, xn_ref, acc_ref, *, eps, approximate_gelu):
    """Streaming path: W1/W2 tiles stream over the inner ('arbitrary') axis."""
    j = pl.program_id(1)

    # per-row-tile init: LayerNorm (cached) + zero the accumulator
    @pl.when(j == 0)
    def _():
        x = x_ref[...].astype(jnp.float32)
        mean = jnp.mean(x, axis=-1, keepdims=True)
        centered = x - mean
        var = jnp.mean(centered * centered, axis=-1, keepdims=True)
        xn = centered * lax.rsqrt(var + eps)
        xn = xn * g_ref[...] + beta_ref[...]
        xn_ref[...] = xn.astype(xn_ref.dtype)
        acc_ref[...] = jnp.zeros_like(acc_ref)

    h = jnp.dot(xn_ref[...], w1_ref[...], preferred_element_type=jnp.float32)
    h = _gelu(h + b1_ref[...], approximate_gelu)
    acc_ref[...] += jnp.dot(h.astype(w2_ref.dtype), w2_ref[...],
                            preferred_element_type=jnp.float32)

    @pl.when(j == pl.num_programs(1) - 1)
    def _():
        o_ref[...] = (acc_ref[...] + b2_ref[...]).astype(o_ref.dtype)


# ----------------------------------------------------------------------------
# Tiling helpers
# ----------------------------------------------------------------------------
def _pick_inner_tile(inner_dim, requested):
    """Largest multiple of 128 that divides inner_dim and is <= requested."""
    if inner_dim <= requested or inner_dim % 128 != 0:
        return inner_dim
    t = max(128, (requested // 128) * 128)
    while t > 128 and inner_dim % t != 0:
        t -= 128
    return t if inner_dim % t == 0 else inner_dim


def _est_resident_vmem(rt, dim, inner_dim, x_bytes, out_bytes, w_bytes):
    weights = 2 * 2 * dim * inner_dim * w_bytes            # W1+W2, double-buffered
    biases = 2 * (3 * dim + inner_dim) * 4
    io = 2 * rt * dim * (x_bytes + out_bytes)              # x / out tiles, 2 buffers
    live = rt * inner_dim * (4 + w_bytes) + rt * dim * 12  # h f32 + cast, x/xn/out
    return weights + biases + io + live


def _est_stream_vmem(rt, it, dim, x_bytes, out_bytes, w_bytes):
    weights = 2 * 2 * dim * it * w_bytes                   # W1 col + W2 row tiles
    biases = 2 * (3 * dim + it) * 4
    io = 2 * rt * dim * (x_bytes + out_bytes)
    scratch = rt * dim * (w_bytes + 4)                     # xn cache + f32 acc
    live = rt * it * (4 + w_bytes) + rt * dim * 8          # GELU f32 intermediate etc.
    return weights + biases + io + scratch + live


# ----------------------------------------------------------------------------
# Wrapper
# ----------------------------------------------------------------------------
def feedforward_pallas(x, gamma, beta, w1, b1, w2, b2, *, eps=1e-5,
                       row_tile=None, inner_tile=None, approximate_gelu=None,
                       force_streaming=False):
    """x: (..., dim) -> (..., dim).  Weights keep their own dtype (bf16 ok)."""
    orig_shape = x.shape
    dim = orig_shape[-1]
    inner_dim = w1.shape[1]

    rows = 1
    for s in orig_shape[:-1]:
        rows *= s
    x2 = x.reshape(rows, dim)

    compute_dtype = w1.dtype                    # MXU operand dtype (no f32 upcast)
    w2 = w2.astype(compute_dtype)
    x_bytes = x2.dtype.itemsize
    out_bytes = jnp.dtype(x.dtype).itemsize
    w_bytes = jnp.dtype(compute_dtype).itemsize

    vmem_cap, num_cores, is_v5 = _hw_info()
    if approximate_gelu is None:
        # exact erf on v5e (MXU hides the VPU polynomial), tanh->EUP elsewhere.
        approximate_gelu = not is_v5

    budget = int(0.60 * vmem_cap)               # headroom for compiler scratch

    # NOTE: dim < 128 produces lane-sparse (masked) output stores; prefer
    # lane-dense dims (multiples of 128) for performance.

    # ---- row-tile target ----------------------------------------------------
    rt_cap = _round_up(rows, 16)                # small row counts -> one fat step
    if row_tile is None:
        rt_target = 512 if vmem_cap < (100 << 20) else 1024
    else:
        rt_target = row_tile
    rt_target = max(16, (min(rt_target, rt_cap) // 16) * 16)

    def _shrink_rt(est_fn, rt0):
        rt_ = rt0
        while rt_ > 16 and est_fn(rt_) > budget:
            rt_ = max(16, ((rt_ // 2) // 16) * 16)
        return rt_

    # ---- path selection: weight-resident (fused) vs streaming ---------------
    want_resident = (not force_streaming) and (inner_tile is None
                                               or inner_tile >= inner_dim)
    probe_rt = min(rt_target, max(16, min(rt_cap, 256)))
    resident_fits = (_est_resident_vmem(probe_rt, dim, inner_dim, x_bytes,
                                        out_bytes, w_bytes) <= budget)
    fused = want_resident and resident_fits

    if fused:
        it = inner_dim
        rt = _shrink_rt(lambda r: _est_resident_vmem(r, dim, inner_dim, x_bytes,
                                                     out_bytes, w_bytes),
                        rt_target)
        est = _est_resident_vmem(rt, dim, inner_dim, x_bytes, out_bytes, w_bytes)
    else:
        if inner_tile is None:
            it_req = 2048 if vmem_cap >= (100 << 20) else 1024
        else:
            it_req = inner_tile
        it = _pick_inner_tile(inner_dim, it_req)
        if inner_tile is None:
            while it > 128 and _est_stream_vmem(min(128, rt_cap), it, dim,
                                                x_bytes, out_bytes,
                                                w_bytes) > budget:
                new_it = _pick_inner_tile(inner_dim, it // 2)
                if new_it == it:
                    break
                it = new_it
        rt = _shrink_rt(lambda r: _est_stream_vmem(r, it, dim, x_bytes,
                                                   out_bytes, w_bytes),
                        rt_target)
        est = _est_stream_vmem(rt, it, dim, x_bytes, out_bytes, w_bytes)

    # ---- balance row tiles across TensorCores (v7x: 2 TCs share 'parallel') --
    n_row = _cdiv(rows, rt)
    if num_cores > 1 and n_row > 1 and n_row % num_cores != 0:
        n_row_target = _round_up(n_row, num_cores)
        rt = max(16, _round_up(_cdiv(rows, n_row_target), 16))
        n_row = _cdiv(rows, rt)
    rows_p = n_row * rt
    if rows_p != rows:
        x2 = jnp.pad(x2, ((0, rows_p - rows), (0, 0)))

    n_inner = inner_dim // it

    # 2-D params broadcast against (rt, D)/(rt, it) tiles; small, so keep f32.
    gamma2 = gamma.reshape(1, dim).astype(jnp.float32)
    beta2 = beta.reshape(1, dim).astype(jnp.float32)
    b1_2 = b1.reshape(1, inner_dim).astype(jnp.float32)
    b2_2 = b2.reshape(1, dim).astype(jnp.float32)

    vmem_limit = int(min(int(0.90 * vmem_cap), max(32 << 20, est + (16 << 20))))

    weight_hbm = 2 * dim * inner_dim * w_bytes * (1 if fused else n_row)
    cost = pl.CostEstimate(
        flops=int(4 * rows_p * dim * inner_dim + 10 * rows_p * dim),
        transcendentals=int(rows_p * inner_dim),
        bytes_accessed=int(rows_p * dim * (x_bytes + out_bytes) + weight_hbm
                           + (3 * dim + inner_dim) * 4),
    )

    if fused:
        out = pl.pallas_call(
            functools.partial(_ff_fused_kernel, eps=eps,
                              approximate_gelu=approximate_gelu),
            out_shape=jax.ShapeDtypeStruct((rows_p, dim), x.dtype),
            grid_spec=pltpu.PrefetchScalarGridSpec(
                num_scalar_prefetch=0,
                grid=(n_row,),
                in_specs=[
                    pl.BlockSpec((rt, dim), lambda i: (i, 0)),           # x tile
                    pl.BlockSpec((1, dim), lambda i: (0, 0)),            # gamma
                    pl.BlockSpec((1, dim), lambda i: (0, 0)),            # beta
                    pl.BlockSpec((dim, inner_dim), lambda i: (0, 0)),    # W1 resident
                    pl.BlockSpec((1, inner_dim), lambda i: (0, 0)),      # b1
                    pl.BlockSpec((inner_dim, dim), lambda i: (0, 0)),    # W2 resident
                    pl.BlockSpec((1, dim), lambda i: (0, 0)),            # b2
                ],
                out_specs=pl.BlockSpec((rt, dim), lambda i: (i, 0)),
            ),
            compiler_params=pltpu.CompilerParams(
                dimension_semantics=("parallel",),
                vmem_limit_bytes=vmem_limit),
            cost_estimate=cost,
        )(x2, gamma2, beta2, w1, b1_2, w2, b2_2)
    else:
        out = pl.pallas_call(
            functools.partial(_ff_stream_kernel, eps=eps,
                              approximate_gelu=approximate_gelu),
            out_shape=jax.ShapeDtypeStruct((rows_p, dim), x.dtype),
            grid_spec=pltpu.PrefetchScalarGridSpec(
                num_scalar_prefetch=0,
                grid=(n_row, n_inner),
                in_specs=[
                    pl.BlockSpec((rt, dim), lambda i, j: (i, 0)),        # x tile
                    pl.BlockSpec((1, dim), lambda i, j: (0, 0)),         # gamma
                    pl.BlockSpec((1, dim), lambda i, j: (0, 0)),         # beta
                    pl.BlockSpec((dim, it), lambda i, j: (0, j)),        # W1 col-tile
                    pl.BlockSpec((1, it), lambda i, j: (0, j)),          # b1 tile
                    pl.BlockSpec((it, dim), lambda i, j: (j, 0)),        # W2 row-tile
                    pl.BlockSpec((1, dim), lambda i, j: (0, 0)),         # b2
                ],
                out_specs=pl.BlockSpec((rt, dim), lambda i, j: (i, 0)),
                scratch_shapes=[
                    pltpu.VMEM((rt, dim), compute_dtype),   # cached LayerNorm out
                    pltpu.VMEM((rt, dim), jnp.float32),     # f32 accumulator
                ],
            ),
            compiler_params=pltpu.CompilerParams(
                dimension_semantics=("parallel", "arbitrary"),
                vmem_limit_bytes=vmem_limit),
            cost_estimate=cost,
        )(x2, gamma2, beta2, w1, b1_2, w2, b2_2)

    if rows_p != rows:
        out = out[:rows]
    return out.reshape(orig_shape)


def _reference(x, gamma, beta, w1, b1, w2, b2, eps=1e-5, approximate_gelu=False):
    """f32 reference mirroring the kernel's bf16 quantization points."""
    f32 = jnp.float32
    xf = x.astype(f32)
    mean = jnp.mean(xf, axis=-1, keepdims=True)
    var = jnp.mean((xf - mean) ** 2, axis=-1, keepdims=True)
    xn = (xf - mean) / jnp.sqrt(var + eps) * gamma.astype(f32) + beta.astype(f32)
    xn = xn.astype(w1.dtype).astype(f32)
    h = xn @ w1.astype(f32) + b1.astype(f32)
    if approximate_gelu:
        h = jax.nn.gelu(h, approximate=True)
    else:
        h = 0.5 * h * (1.0 + lax.erf(h * jnp.float32(_SQRT_HALF)))
    h = h.astype(w2.dtype).astype(f32)
    return h @ w2.astype(f32) + b2.astype(f32)


if __name__ == "__main__":
    # Small transformer-ish shapes (lane-dense dim).
    batch, seq, dim, inner_dim = 2, 16, 128, 512

    key = jax.random.PRNGKey(0)
    kx, kw1, kb1, kw2, kb2 = jax.random.split(key, 5)

    x = jax.random.normal(kx, (batch, seq, dim), jnp.float32).astype(jnp.bfloat16)

    gamma = jnp.ones((dim,), jnp.float32)
    beta = jnp.zeros((dim,), jnp.float32)
    w1 = (jax.random.normal(kw1, (dim, inner_dim), jnp.float32) * 0.05).astype(jnp.bfloat16)
    b1 = jax.random.normal(kb1, (inner_dim,), jnp.float32) * 0.01
    w2 = (jax.random.normal(kw2, (inner_dim, dim), jnp.float32) * 0.05).astype(jnp.bfloat16)
    b2 = jax.random.normal(kb2, (dim,), jnp.float32) * 0.01

    _, _, _is_v5 = _hw_info()
    approx = not _is_v5   # resolved GELU flavour, mirrored in the reference

    ref = _reference(x, gamma, beta, w1, b1, w2, b2, approximate_gelu=approx)

    # Path 1: auto-tiled (weight-resident fused path at this size).
    out = feedforward_pallas(x, gamma, beta, w1, b1, w2, b2,
                             approximate_gelu=approx)
    out = jax.block_until_ready(out)
    assert out.shape == x.shape
    assert jnp.allclose(out.astype(jnp.float32), ref, atol=2e-2, rtol=2e-2), \
        "fused path mismatch vs reference"

    # Path 2: force the streaming (W1/W2-tiled, f32-accumulator) path so both
    # kernels are exercised regardless of chip.
    out_s = feedforward_pallas(x, gamma, beta, w1, b1, w2, b2,
                               approximate_gelu=approx, force_streaming=True,
                               row_tile=16, inner_tile=128)
    out_s = jax.block_until_ready(out_s)
    assert jnp.allclose(out_s.astype(jnp.float32), ref, atol=2e-2, rtol=2e-2), \
        "streaming path mismatch vs reference"

    print("KERNEL_OK")
</pallas_src>

<mosaic_0001>
module attributes {stable_mosaic.version = 11 : i64} {
  func.func @_ff_fused_kernel(%arg0: i32, %arg1: memref<32x128xbf16, #tpu.memory_space<vmem>>, %arg2: memref<1x128xf32, #tpu.memory_space<vmem>>, %arg3: memref<1x128xf32, #tpu.memory_space<vmem>>, %arg4: memref<128x512xbf16, #tpu.memory_space<vmem>>, %arg5: memref<1x512xf32, #tpu.memory_space<vmem>>, %arg6: memref<512x128xbf16, #tpu.memory_space<vmem>>, %arg7: memref<1x128xf32, #tpu.memory_space<vmem>>, %arg8: memref<32x128xbf16, #tpu.memory_space<vmem>>) attributes {dimension_semantics = [#tpu.dimension_semantics<parallel>], iteration_bounds = array<i64: 1>, scalar_prefetch = 0 : i64, scratch_operands = 0 : i64, tpu.core_type = #tpu.core_type<tc>, window_params = [{transform_indices = @transform_0, window_bounds = array<i64: 32, 128>}, {pipeline_mode = #tpu.pipeline_mode<synchronous>, transform_indices = @transform_1, window_bounds = array<i64: 1, 128>}, {pipeline_mode = #tpu.pipeline_mode<synchronous>, transform_indices = @transform_2, window_bounds = array<i64: 1, 128>}, {pipeline_mode = #tpu.pipeline_mode<synchronous>, transform_indices = @transform_3, window_bounds = array<i64: 128, 512>}, {pipeline_mode = #tpu.pipeline_mode<synchronous>, transform_indices = @transform_4, window_bounds = array<i64: 1, 512>}, {pipeline_mode = #tpu.pipeline_mode<synchronous>, transform_indices = @transform_5, window_bounds = array<i64: 512, 128>}, {pipeline_mode = #tpu.pipeline_mode<synchronous>, transform_indices = @transform_6, window_bounds = array<i64: 1, 128>}, {transform_indices = @transform_7, window_bounds = array<i64: 32, 128>}]} {
    %c0 = arith.constant 0 : index
    %c0_0 = arith.constant 0 : index
    %0 = vector.load %arg1[%c0, %c0_0] : memref<32x128xbf16, #tpu.memory_space<vmem>>, vector<32x128xbf16>
    %1 = arith.extf %0 : vector<32x128xbf16> to vector<32x128xf32>
    %cst = arith.constant dense<0.000000e+00> : vector<32xf32>
    %2 = vector.multi_reduction <add>, %1, %cst [1] : vector<32x128xf32> to vector<32xf32>
    %3 = vector.shape_cast %2 : vector<32xf32> to vector<32x1xf32>
    %cst_1 = arith.constant 1.280000e+02 : f32
    %4 = vector.broadcast %cst_1 : f32 to vector<32x1xf32>
    %5 = arith.divf %3, %4 : vector<32x1xf32>
    %6 = vector.broadcast %5 : vector<32x1xf32> to vector<32x128xf32>
    %7 = arith.subf %1, %6 : vector<32x128xf32>
    %8 = arith.mulf %7, %7 : vector<32x128xf32>
    %cst_2 = arith.constant dense<0.000000e+00> : vector<32xf32>
    %9 = vector.multi_reduction <add>, %8, %cst_2 [1] : vector<32x128xf32> to vector<32xf32>
    %10 = vector.shape_cast %9 : vector<32xf32> to vector<32x1xf32>
    %cst_3 = arith.constant 1.280000e+02 : f32
    %11 = vector.broadcast %cst_3 : f32 to vector<32x1xf32>
    %12 = arith.divf %10, %11 : vector<32x1xf32>
    %cst_4 = arith.constant 9.99999974E-6 : f32
    %13 = vector.broadcast %cst_4 : f32 to vector<32x1xf32>
    %14 = arith.addf %12, %13 : vector<32x1xf32>
    %15 = math.rsqrt %14 : vector<32x1xf32>
    %16 = vector.broadcast %15 : vector<32x1xf32> to vector<32x128xf32>
    %17 = arith.mulf %7, %16 : vector<32x128xf32>
    %c0_5 = arith.constant 0 : index
    %c0_6 = arith.constant 0 : index
    %18 = vector.load %arg2[%c0_5, %c0_6] : memref<1x128xf32, #tpu.memory_space<vmem>>, vector<1x128xf32>
    %19 = vector.broadcast %18 : vector<1x128xf32> to vector<32x128xf32>
    %20 = arith.mulf %17, %19 : vector<32x128xf32>
    %c0_7 = arith.constant 0 : index
    %c0_8 = arith.constant 0 : index
    %21 = vector.load %arg3[%c0_7, %c0_8] : memref<1x128xf32, #tpu.memory_space<vmem>>, vector<1x128xf32>
    %22 = vector.broadcast %21 : vector<1x128xf32> to vector<32x128xf32>
    %23 = arith.addf %20, %22 : vector<32x128xf32>
    %24 = arith.truncf %23 : vector<32x128xf32> to vector<32x128xbf16>
    %c0_9 = arith.constant 0 : index
    %c0_10 = arith.constant 0 : index
    %25 = vector.load %arg4[%c0_9, %c0_10] : memref<128x512xbf16, #tpu.memory_space<vmem>>, vector<128x512xbf16>
    %cst_11 = arith.constant dense<0.000000e+00> : vector<32x512xf32>
    %26 = tpu.matmul %24, %25, %cst_11 {dimension_numbers = #tpu.dot_dimension_numbers<[1], [0], [0], [1], [0, 0, 1, 1], [], []>} : vector<32x128xbf16>, vector<128x512xbf16>, vector<32x512xf32> -> vector<32x512xf32>
    %c0_12 = arith.constant 0 : index
    %c0_13 = arith.constant 0 : index
    %27 = vector.load %arg5[%c0_12, %c0_13] : memref<1x512xf32, #tpu.memory_space<vmem>>, vector<1x512xf32>
    %28 = vector.broadcast %27 : vector<1x512xf32> to vector<32x512xf32>
    %29 = arith.addf %26, %28 : vector<32x512xf32>
    %30 = arith.mulf %29, %29 : vector<32x512xf32>
    %31 = arith.mulf %29, %30 : vector<32x512xf32>
    %cst_14 = arith.constant 4.471500e-02 : f32
    %32 = vector.broadcast %cst_14 : f32 to vector<32x512xf32>
    %33 = arith.mulf %32, %31 : vector<32x512xf32>
    %34 = arith.addf %29, %33 : vector<32x512xf32>
    %cst_15 = arith.constant 0.797884583 : f32
    %35 = vector.broadcast %cst_15 : f32 to vector<32x512xf32>
    %36 = arith.mulf %35, %34 : vector<32x512xf32>
    %37 = math.tanh %36 : vector<32x512xf32>
    %cst_16 = arith.constant 1.000000e+00 : f32
    %38 = vector.broadcast %cst_16 : f32 to vector<32x512xf32>
    %39 = arith.addf %38, %37 : vector<32x512xf32>
    %cst_17 = arith.constant 5.000000e-01 : f32
    %40 = vector.broadcast %cst_17 : f32 to vector<32x512xf32>
    %41 = arith.mulf %40, %39 : vector<32x512xf32>
    %42 = arith.mulf %29, %41 : vector<32x512xf32>
    %43 = arith.truncf %42 : vector<32x512xf32> to vector<32x512xbf16>
    %c0_18 = arith.constant 0 : index
    %c0_19 = arith.constant 0 : index
    %44 = vector.load %arg6[%c0_18, %c0_19] : memref<512x128xbf16, #tpu.memory_space<vmem>>, vector<512x128xbf16>
    %cst_20 = arith.constant dense<0.000000e+00> : vector<32x128xf32>
    %45 = tpu.matmul %43, %44, %cst_20 {dimension_numbers = #tpu.dot_dimension_numbers<[1], [0], [0], [1], [0, 0, 1, 1], [], []>} : vector<32x512xbf16>, vector<512x128xbf16>, vector<32x128xf32> -> vector<32x128xf32>
    %c0_21 = arith.constant 0 : index
    %c0_22 = arith.constant 0 : index
    %46 = vector.load %arg7[%c0_21, %c0_22] : memref<1x128xf32, #tpu.memory_space<vmem>>, vector<1x128xf32>
    %47 = vector.broadcast %46 : vector<1x128xf32> to vector<32x128xf32>
    %48 = arith.addf %45, %47 : vector<32x128xf32>
    %49 = arith.truncf %48 : vector<32x128xf32> to vector<32x128xbf16>
    %c0_23 = arith.constant 0 : index
    %c0_24 = arith.constant 0 : index
    %50 = vector.load %arg8[%c0_23, %c0_24] : memref<32x128xbf16, #tpu.memory_space<vmem>>, vector<32x128xbf16>
    tpu.vector_store %arg8[%c0_23, %c0_24], %49 {strides = array<i32>} : memref<32x128xbf16, #tpu.memory_space<vmem>>, vector<32x128xbf16>,
    return
  }
  func.func @transform_0(%arg0: i32) -> (i32, i32) {
    %c0_i32 = arith.constant 0 : i32
    %c0_i32_0 = arith.constant 0 : i32
    return %arg0, %c0_i32 : i32, i32
  }
  func.func @transform_1(%arg0: i32) -> (i32, i32) {
    %c0_i32 = arith.constant 0 : i32
    %c0_i32_0 = arith.constant 0 : i32
    %c0_i32_1 = arith.constant 0 : i32
    return %c0_i32, %c0_i32_0 : i32, i32
  }
  func.func @transform_2(%arg0: i32) -> (i32, i32) {
    %c0_i32 = arith.constant 0 : i32
    %c0_i32_0 = arith.constant 0 : i32
    %c0_i32_1 = arith.constant 0 : i32
    return %c0_i32, %c0_i32_0 : i32, i32
  }
  func.func @transform_3(%arg0: i32) -> (i32, i32) {
    %c0_i32 = arith.constant 0 : i32
    %c0_i32_0 = arith.constant 0 : i32
    %c0_i32_1 = arith.constant 0 : i32
    return %c0_i32, %c0_i32_0 : i32, i32
  }
  func.func @transform_4(%arg0: i32) -> (i32, i32) {
    %c0_i32 = arith.constant 0 : i32
    %c0_i32_0 = arith.constant 0 : i32
    %c0_i32_1 = arith.constant 0 : i32
    return %c0_i32, %c0_i32_0 : i32, i32
  }
  func.func @transform_5(%arg0: i32) -> (i32, i32) {
    %c0_i32 = arith.constant 0 : i32
    %c0_i32_0 = arith.constant 0 : i32
    %c0_i32_1 = arith.constant 0 : i32
    return %c0_i32, %c0_i32_0 : i32, i32
  }
  func.func @transform_6(%arg0: i32) -> (i32, i32) {
    %c0_i32 = arith.constant 0 : i32
    %c0_i32_0 = arith.constant 0 : i32
    %c0_i32_1 = arith.constant 0 : i32
    return %c0_i32, %c0_i32_0 : i32, i32
  }
  func.func @transform_7(%arg0: i32) -> (i32, i32) {
    %c0_i32 = arith.constant 0 : i32
    %c0_i32_0 = arith.constant 0 : i32
    return %arg0, %c0_i32 : i32, i32
  }
}

</mosaic_0001>

<llo_original>
// kernel: tpu_custom_call.1
$region0: #{tpu_custom_call.1}
  #allocation0 [shape = 'u32[]', space=smem, size = 0x4, offset = 0x4, fixed_abs, tag = 'smem constant byte address 0x4 - core index']
  #allocation1 [shape = 'u32[144,128]{1,0:T(1,128)}', space=vmem, size = 0x12000, scoped, tag = 'internal scratch']
  %s0 = inlined_call_operand.hbm [shape: bf16[32,128], index: 0, kind: input, shape index: {}]
  %s1 = inlined_call_operand.vmem [shape: f32[1,128], index: 1, kind: input, shape index: {}]
  %s2 = inlined_call_operand.vmem [shape: f32[1,128], index: 2, kind: input, shape index: {}]
  %s3 = inlined_call_operand.hbm [shape: bf16[128,512], index: 3, kind: input, shape index: {}]
  %s4 = inlined_call_operand.vmem [shape: f32[1,512], index: 4, kind: input, shape index: {}]
  %s5 = inlined_call_operand.hbm [shape: bf16[512,128], index: 5, kind: input, shape index: {}]
  %s6 = inlined_call_operand.vmem [shape: f32[1,128], index: 6, kind: input, shape index: {}]
  %s7 = inlined_call_operand.hbm [shape: bf16[32,128], index: 7, kind: output, shape index: {}]
  %s8 = sld [smem:[#allocation0]]
  $region50: #{tpu_custom_call.1} parent=0
    _
  %s10 = ssub.s32 1, %s8
  %s11 = scalar_select 0, %s10, %s8
  $region1: #{tpu_custom_call.1} parent=0
    #allocation2 [shape = 'u8[8192]{0}', space=vmem, size = 0x2000, scoped, tag = 'input window, operand 0, single buffered']
    #allocation3 [shape = 's32[1]{0}', space=sflag, size = 0x4, scoped, tag = 'scoped memory for tpu_custom_call.1']
    #allocation4 [shape = 's32[1]{0}', space=sflag, size = 0x4, scoped, tag = 'scoped memory for tpu_custom_call.1']
    #allocation5 [shape = 'u8[131072]{0}', space=vmem, size = 0x20000, scoped, tag = 'input window, operand 3, single buffered']
    #allocation6 [shape = 's32[1]{0}', space=sflag, size = 0x4, scoped, tag = 'scoped memory for tpu_custom_call.1']
    #allocation7 [shape = 'u8[131072]{0}', space=vmem, size = 0x20000, scoped, tag = 'input window, operand 5, single buffered']
    #allocation8 [shape = 'u8[8192]{0}', space=vmem, size = 0x2000, scoped, tag = 'output window, operand 0, single buffered']
    %12 = vsyncpa [#allocation3], 0
    %13 = vsyncpa [#allocation6], 0
    %14 = vsyncpa [#allocation4], 0
    // Predicated region
    $region2: #{tpu_custom_call.1} parent=1 // pred_check
      _
    $region3: #{tpu_custom_call.1} parent=1 // pred_check_branch
      %16 = sbr.rel (0) target = $region5
    $region4: #{tpu_custom_call.1} parent=1 // pred_region
      %s18 = ssub.s32 256, 256
      %19 = vsyncadd [#allocation3], %s18
      %s20 = sshll.u32 [#allocation2], 4
      %s21 = int_to_ptr.vmem [resolvable:$true] %s20
      %26 = dma.hbm_to_vmem [thread:$0]  %s0, 256, %s21, [#allocation3], 64, 64, 4
    $region5: #{tpu_custom_call.1} parent=1 // pred_fallthru
      _
    // Predicated region
    $region6: #{tpu_custom_call.1} parent=1 // pred_check
      _
    $region7: #{tpu_custom_call.1} parent=1 // pred_check_branch
      %28 = sbr.rel (0) target = $region9
    $region8: #{tpu_custom_call.1} parent=1 // pred_region
      _
    $region9: #{tpu_custom_call.1} parent=1 // pred_fallthru
      _
    // Predicated region
    $region10: #{tpu_custom_call.1} parent=1 // pred_check
      _
    $region11: #{tpu_custom_call.1} parent=1 // pred_check_branch
      %30 = sbr.rel (0) target = $region13
    $region12: #{tpu_custom_call.1} parent=1 // pred_region
      _
    $region13: #{tpu_custom_call.1} parent=1 // pred_fallthru
      _
    // Predicated region
    $region14: #{tpu_custom_call.1} parent=1 // pred_check
      _
    $region15: #{tpu_custom_call.1} parent=1 // pred_check_branch
      %32 = sbr.rel (0) target = $region17
    $region16: #{tpu_custom_call.1} parent=1 // pred_region
      %s34 = ssub.s32 4096, 4096
      %35 = vsyncadd [#allocation6], %s34
      %s36 = sshll.u32 [#allocation5], 4
      %s37 = int_to_ptr.vmem [resolvable:$true] %s36
      %42 = dma.hbm_to_vmem [thread:$0]  %s3, 4096, %s37, [#allocation6], 256, 256, 16
    $region17: #{tpu_custom_call.1} parent=1 // pred_fallthru
      _
    // Predicated region
    $region18: #{tpu_custom_call.1} parent=1 // pred_check
      _
    $region19: #{tpu_custom_call.1} parent=1 // pred_check_branch
      %44 = sbr.rel (0) target = $region21
    $region20: #{tpu_custom_call.1} parent=1 // pred_region
      _
    $region21: #{tpu_custom_call.1} parent=1 // pred_fallthru
      _
    // Predicated region
    $region22: #{tpu_custom_call.1} parent=1 // pred_check
      _
    $region23: #{tpu_custom_call.1} parent=1 // pred_check_branch
      %46 = sbr.rel (0) target = $region25
    $region24: #{tpu_custom_call.1} parent=1 // pred_region
      %s48 = ssub.s32 4096, 4096
      %49 = vsyncadd [#allocation6], %s48
      %s50 = sshll.u32 [#allocation7], 4
      %s51 = int_to_ptr.vmem [resolvable:$true] %s50
      %56 = dma.hbm_to_vmem [thread:$0]  %s5, 4096, %s51, [#allocation6], 64, 64, 4
    $region25: #{tpu_custom_call.1} parent=1 // pred_fallthru
      _
    // Predicated region
    $region26: #{tpu_custom_call.1} parent=1 // pred_check
      _
    $region27: #{tpu_custom_call.1} parent=1 // pred_check_branch
      %58 = sbr.rel (0) target = $region29
    $region28: #{tpu_custom_call.1} parent=1 // pred_region
      _
    $region29: #{tpu_custom_call.1} parent=1 // pred_fallthru
      _
    // Predicated region
    $region30: #{tpu_custom_call.1} parent=1 // pred_check
      _
    $region31: #{tpu_custom_call.1} parent=1 // pred_check_branch
      %60 = sbr.rel (0) target = $region33
    $region32: #{tpu_custom_call.1} parent=1 // pred_region
      %61 = dma.done [#allocation3], 256
    $region33: #{tpu_custom_call.1} parent=1 // pred_fallthru
      _
    // Predicated region
    $region34: #{tpu_custom_call.1} parent=1 // pred_check
      _
    $region35: #{tpu_custom_call.1} parent=1 // pred_check_branch
      %63 = sbr.rel (0) target = $region37
    $region36: #{tpu_custom_call.1} parent=1 // pred_region
      %64 = dma.done [#allocation6], 4096
    $region37: #{tpu_custom_call.1} parent=1 // pred_fallthru
      _
    // Predicated region
    $region38: #{tpu_custom_call.1} parent=1 // pred_check
      _
    $region39: #{tpu_custom_call.1} parent=1 // pred_check_branch
      %66 = sbr.rel (0) target = $region41
    $region40: #{tpu_custom_call.1} parent=1 // pred_region
      %67 = dma.done [#allocation6], 4096
    $region41: #{tpu_custom_call.1} parent=1 // pred_fallthru
      _
    %v69 = vld [vmem:[#allocation2] sm:$0xf]
    %v70 = vld [vmem:[#allocation2 + $0x4] sm:$0xf]
    %v71 = vld [vmem:[#allocation2 + $0x8] sm:$0xf]
    %v72 = vld [vmem:[#allocation2 + $0xc] sm:$0xf]
    %v73 = vunpack.c.l.bf16 %v69
    %v74 = vunpack.c.l.bf16 %v70
    %v75 = vunpack.c.l.bf16 %v71
    %v76 = vunpack.c.l.bf16 %v72
    %77 = vadd.xlane.f32.xlu0 %v73
    %v78 = vpop.xlane.xlu0 %77
    %79 = vadd.xlane.f32.xlu0 %v74
    %v80 = vpop.xlane.xlu0 %79
    %81 = vadd.xlane.f32.xlu0 %v75
    %v82 = vpop.xlane.xlu0 %81
    %83 = vadd.xlane.f32.xlu0 %v76
    %v84 = vpop.xlane.xlu0 %83
    %v85 = vrcp.pop 128.0
    %v86 = vmul.f32 %v78, %v85
    %v87 = vmul.f32 %v80, %v85
    %v88 = vmul.f32 %v82, %v85
    %v89 = vmul.f32 %v84, %v85
    %v90 = vsub.f32 %v73, %v86
    %v91 = vsub.f32 %v74, %v87
    %v92 = vsub.f32 %v75, %v88
    %v93 = vsub.f32 %v76, %v89
    %v94 = vmul.f32 %v90, %v90
    %v95 = vmul.f32 %v91, %v91
    %v96 = vmul.f32 %v92, %v92
    %v97 = vmul.f32 %v93, %v93
    %98 = vadd.xlane.f32.xlu0 %v94
    %v99 = vpop.xlane.xlu0 %98
    %100 = vadd.xlane.f32.xlu0 %v95
    %v101 = vpop.xlane.xlu0 %100
    %102 = vadd.xlane.f32.xlu0 %v96
    %v103 = vpop.xlane.xlu0 %102
    %104 = vadd.xlane.f32.xlu0 %v97
    %v105 = vpop.xlane.xlu0 %104
    %v106 = vmul.f32 %v99, %v85
    %v107 = vmul.f32 %v101, %v85
    %v108 = vmul.f32 %v103, %v85
    %v109 = vmul.f32 %v105, %v85
    %v110 = vadd.f32 %v106, 1e-05
    %v111 = vadd.f32 %v107, 1e-05
    %v112 = vadd.f32 %v108, 1e-05
    %v113 = vadd.f32 %v109, 1e-05
    %v114 = vrsqrt.pop %v110
    %v115 = vrsqrt.pop %v111
    %v116 = vrsqrt.pop %v112
    %v117 = vrsqrt.pop %v113
    %v118 = vmul.f32 %v90, %v114
    %v119 = vmul.f32 %v91, %v115
    %v120 = vmul.f32 %v92, %v116
    %v121 = vmul.f32 %v93, %v117
    %v122 = vld [vmem:[%s1] sm:$0x1]
    %v124 = vlaneseq
    %v125 = vshrl.u32 %v124, 7
    %v126 = vsub.s32 0, %v125
    %v127 = vrot.slane %v122, %v126
    %v129 = vmul.f32 %v118, %v127
    %v130 = vmul.f32 %v119, %v127
    %v131 = vmul.f32 %v120, %v127
    %v132 = vmul.f32 %v121, %v127
    %v133 = vld [vmem:[%s2] sm:$0x1]
    %v135 = vlaneseq
    %v136 = vshrl.u32 %v135, 7
    %v137 = vsub.s32 0, %v136
    %v138 = vrot.slane %v133, %v137
    %v140 = vadd.f32 %v129, %v138
    %v141 = vadd.f32 %v130, %v138
    %v142 = vadd.f32 %v131, %v138
    %v143 = vadd.f32 %v132, %v138
    %v144 = vpack.c.bf16 %v141, %v140
    %v145 = vpack.c.bf16 %v143, %v142
    %v146 = vld [vmem:[#allocation5] sm:$0xff]
    %v147 = vld [vmem:[#allocation5 + $0x8] sm:$0xff]
    %v148 = vld [vmem:[#allocation5 + $0x10] sm:$0xff]
    %v149 = vld [vmem:[#allocation5 + $0x18] sm:$0xff]
    %v150 = vld [vmem:[#allocation5 + $0x20] sm:$0xff]
    %v151 = vld [vmem:[#allocation5 + $0x28] sm:$0xff]
    %v152 = vld [vmem:[#allocation5 + $0x30] sm:$0xff]
    %v153 = vld [vmem:[#allocation5 + $0x38] sm:$0xff]
    %v154 = vld [vmem:[#allocation5 + $0x40] sm:$0xff]
    %v155 = vld [vmem:[#allocation5 + $0x48] sm:$0xff]
    %v156 = vld [vmem:[#allocation5 + $0x50] sm:$0xff]
    %v157 = vld [vmem:[#allocation5 + $0x58] sm:$0xff]
    %v158 = vld [vmem:[#allocation5 + $0x60] sm:$0xff]
    %v159 = vld [vmem:[#allocation5 + $0x68] sm:$0xff]
    %v160 = vld [vmem:[#allocation5 + $0x70] sm:$0xff]
    %v161 = vld [vmem:[#allocation5 + $0x78] sm:$0xff]
    %v162 = vld [vmem:[#allocation5 + $0x80] sm:$0xff]
    %v163 = vld [vmem:[#allocation5 + $0x88] sm:$0xff]
    %v164 = vld [vmem:[#allocation5 + $0x90] sm:$0xff]
    %v165 = vld [vmem:[#allocation5 + $0x98] sm:$0xff]
    %v166 = vld [vmem:[#allocation5 + $0xa0] sm:$0xff]
    %v167 = vld [vmem:[#allocation5 + $0xa8] sm:$0xff]
    %v168 = vld [vmem:[#allocation5 + $0xb0] sm:$0xff]
    %v169 = vld [vmem:[#allocation5 + $0xb8] sm:$0xff]
    %v170 = vld [vmem:[#allocation5 + $0xc0] sm:$0xff]
    %v171 = vld [vmem:[#allocation5 + $0xc8] sm:$0xff]
    %v172 = vld [vmem:[#allocation5 + $0xd0] sm:$0xff]
    %v173 = vld [vmem:[#allocation5 + $0xd8] sm:$0xff]
    %v174 = vld [vmem:[#allocation5 + $0xe0] sm:$0xff]
    %v175 = vld [vmem:[#allocation5 + $0xe8] sm:$0xff]
    %v176 = vld [vmem:[#allocation5 + $0xf0] sm:$0xff]
    %v177 = vld [vmem:[#allocation5 + $0xf8] sm:$0xff]
    %v178 = vld [vmem:[%s4] sm:$0xf]
    %v180 = vlaneseq
    %v181 = vshrl.u32 %v180, 7
    %v182 = vsub.s32 0, %v181
    %v183 = vrot.slane %v178, %v182
    %v184 = vlaneseq
    %v185 = vshrl.u32 %v184, 7
    %v186 = vsub.s32 1, %v185
    %v187 = vrot.slane %v178, %v186
    %v188 = vlaneseq
    %v189 = vshrl.u32 %v188, 7
    %v190 = vsub.s32 2, %v189
    %v191 = vrot.slane %v178, %v190
    %v192 = vlaneseq
    %v193 = vshrl.u32 %v192, 7
    %v194 = vsub.s32 3, %v193
    %v195 = vrot.slane %v178, %v194
    %v232 = vunpack.c.l.b16 %v146
    %v233 = vunpack.c.h.b16 %v146
    %v234 = vunpack.c.l.b16 %v147
    %v235 = vunpack.c.h.b16 %v147
    %v236 = vunpack.c.l.b16 %v148
    %v237 = vunpack.c.h.b16 %v148
    %v238 = vunpack.c.l.b16 %v149
    %v239 = vunpack.c.h.b16 %v149
    %v240 = vunpack.c.l.b16 %v150
    %v241 = vunpack.c.h.b16 %v150
    %v242 = vunpack.c.l.b16 %v151
    %v243 = vunpack.c.h.b16 %v151
    %v244 = vunpack.c.l.b16 %v152
    %v245 = vunpack.c.h.b16 %v152
    %v246 = vunpack.c.l.b16 %v153
    %v247 = vunpack.c.h.b16 %v153
    %v248 = vunpack.c.l.b16 %v154
    %v249 = vunpack.c.h.b16 %v154
    %v250 = vunpack.c.l.b16 %v155
    %v251 = vunpack.c.h.b16 %v155
    %v252 = vunpack.c.l.b16 %v156
    %v253 = vunpack.c.h.b16 %v156
    %v254 = vunpack.c.l.b16 %v157
    %v255 = vunpack.c.h.b16 %v157
    %v256 = vunpack.c.l.b16 %v158
    %v257 = vunpack.c.h.b16 %v158
    %v258 = vunpack.c.l.b16 %v159
    %v259 = vunpack.c.h.b16 %v159
    %v260 = vunpack.c.l.b16 %v160
    %v261 = vunpack.c.h.b16 %v160
    %v262 = vunpack.c.l.b16 %v161
    %v263 = vunpack.c.h.b16 %v161
    %v264 = vunpack.c.l.b16 %v162
    %v265 = vunpack.c.h.b16 %v162
    %v266 = vunpack.c.l.b16 %v163
    %v267 = vunpack.c.h.b16 %v163
    %v268 = vunpack.c.l.b16 %v164
    %v269 = vunpack.c.h.b16 %v164
    %v270 = vunpack.c.l.b16 %v165
    %v271 = vunpack.c.h.b16 %v165
    %v272 = vunpack.c.l.b16 %v166
    %v273 = vunpack.c.h.b16 %v166
    %v274 = vunpack.c.l.b16 %v167
    %v275 = vunpack.c.h.b16 %v167
    %v276 = vunpack.c.l.b16 %v168
    %v277 = vunpack.c.h.b16 %v168
    %v278 = vunpack.c.l.b16 %v169
    %v279 = vunpack.c.h.b16 %v169
    %v280 = vunpack.c.l.b16 %v170
    %v281 = vunpack.c.h.b16 %v170
    %v282 = vunpack.c.l.b16 %v171
    %v283 = vunpack.c.h.b16 %v171
    %v284 = vunpack.c.l.b16 %v172
    %v285 = vunpack.c.h.b16 %v172
    %v286 = vunpack.c.l.b16 %v173
    %v287 = vunpack.c.h.b16 %v173
    %v288 = vunpack.c.l.b16 %v174
    %v289 = vunpack.c.h.b16 %v174
    %v290 = vunpack.c.l.b16 %v175
    %v291 = vunpack.c.h.b16 %v175
    %v292 = vunpack.c.l.b16 %v176
    %v293 = vunpack.c.h.b16 %v176
    %v294 = vunpack.c.l.b16 %v177
    %v295 = vunpack.c.h.b16 %v177
    %v296 = vpack.c.b16 %v236, %v232
    %v297 = vpack.c.b16 %v237, %v233
    %v298 = vpack.c.b16 %v238, %v234
    %v299 = vpack.c.b16 %v239, %v235
    %v300 = vpack.c.b16 %v244, %v240
    %v301 = vpack.c.b16 %v245, %v241
    %v302 = vpack.c.b16 %v246, %v242
    %v303 = vpack.c.b16 %v247, %v243
    %v304 = vpack.c.b16 %v252, %v248
    %v305 = vpack.c.b16 %v253, %v249
    %v306 = vpack.c.b16 %v254, %v250
    %v307 = vpack.c.b16 %v255, %v251
    %v308 = vpack.c.b16 %v260, %v256
    %v309 = vpack.c.b16 %v261, %v257
    %v310 = vpack.c.b16 %v262, %v258
    %v311 = vpack.c.b16 %v263, %v259
    %v312 = vpack.c.b16 %v268, %v264
    %v313 = vpack.c.b16 %v269, %v265
    %v314 = vpack.c.b16 %v270, %v266
    %v315 = vpack.c.b16 %v271, %v267
    %v316 = vpack.c.b16 %v276, %v272
    %v317 = vpack.c.b16 %v277, %v273
    %v318 = vpack.c.b16 %v278, %v274
    %v319 = vpack.c.b16 %v279, %v275
    %v320 = vpack.c.b16 %v284, %v280
    %v321 = vpack.c.b16 %v285, %v281
    %v322 = vpack.c.b16 %v286, %v282
    %v323 = vpack.c.b16 %v287, %v283
    %v324 = vpack.c.b16 %v292, %v288
    %v325 = vpack.c.b16 %v293, %v289
    %v326 = vpack.c.b16 %v294, %v290
    %v327 = vpack.c.b16 %v295, %v291
    %360 = vmatprep.subr.bf16.mxu0 %v297
    %361 = vmatpush1.bf16.msra.mxu0 %v296
    %362 = vmatprep.subr.bf16.mxu0 %v301
    %363 = vmatpush1.bf16.msra.mxu0 %v300
    %364 = vmatprep.subr.bf16.mxu0 %v305
    %365 = vmatpush1.bf16.msra.mxu0 %v304
    %366 = vmatprep.subr.bf16.mxu0 %v309
    %367 = vmatpush1.bf16.msra.mxu0 %v308
    %368 = vmatprep.subr.bf16.mxu0 %v313
    %369 = vmatpush1.bf16.msra.mxu0 %v312
    %370 = vmatprep.subr.bf16.mxu0 %v317
    %371 = vmatpush1.bf16.msra.mxu0 %v316
    %372 = vmatprep.subr.bf16.mxu0 %v321
    %373 = vmatpush1.bf16.msra.mxu0 %v320
    %374 = vmatprep.subr.bf16.mxu0 %v325
    %375 = vmatpush1.bf16.msra.mxu0 %v324
    %376 = vmatprep.subr.bf16.mxu0 0
    %377 = vmatpush1.bf16.msra.mxu0 0
    %378 = vmatprep.subr.bf16.mxu0 0
    %379 = vmatpush1.bf16.msra.mxu0 0
    %380 = vmatprep.subr.bf16.mxu0 0
    %381 = vmatpush1.bf16.msra.mxu0 0
    %382 = vmatprep.subr.bf16.mxu0 0
    %383 = vmatpush1.bf16.msra.mxu0 0
    %384 = vmatprep.subr.bf16.mxu0 0
    %385 = vmatpush1.bf16.msra.mxu0 0
    %386 = vmatprep.subr.bf16.mxu0 0
    %387 = vmatpush1.bf16.msra.mxu0 0
    %388 = vmatprep.subr.bf16.mxu0 0
    %389 = vmatpush1.bf16.msra.mxu0 0
    %390 = vmatprep.subr.bf16.mxu0 0
    %391 = vmatpush1.bf16.msra.mxu0 0
    %392 = vmatprep.mubr.bf16.mxu0 0
    %393 = vmatmul.mubr.bf16.gmra.mrb[0].mxu0 %v144
    %v394 = vpop.f32.mrb[0].mxu0
    %v395 = vadd.f32 %v183, %v394
    %v396 = vpop.f32.mrb[0].mxu0
    %v397 = vadd.f32 %v187, %v396
    %v398 = vpop.f32.mrb[0].mxu0
    %v399 = vadd.f32 %v183, %v398
    %v400 = vpop.f32.mrb[0].mxu0
    %v401 = vadd.f32 %v187, %v400
    %402 = vmatprep.mubr.bf16.mxu0 0
    %403 = vmatmul.mubr.bf16.gmra.mrb[0].mxu0 %v145
    %v404 = vpop.f32.mrb[0].mxu0
    %v405 = vadd.f32 %v183, %v404
    %v406 = vpop.f32.mrb[0].mxu0
    %v407 = vadd.f32 %v187, %v406
    %v408 = vpop.f32.mrb[0].mxu0
    %v409 = vadd.f32 %v183, %v408
    %v410 = vpop.f32.mrb[0].mxu0
    %v411 = vadd.f32 %v187, %v410
    %412 = vdwg.mxu0
    %413 = vmatprep.subr.bf16.mxu0 %v299
    %414 = vmatpush1.bf16.msra.mxu0 %v298
    %415 = vmatprep.subr.bf16.mxu0 %v303
    %416 = vmatpush1.bf16.msra.mxu0 %v302
    %417 = vmatprep.subr.bf16.mxu0 %v307
    %418 = vmatpush1.bf16.msra.mxu0 %v306
    %419 = vmatprep.subr.bf16.mxu0 %v311
    %420 = vmatpush1.bf16.msra.mxu0 %v310
    %421 = vmatprep.subr.bf16.mxu0 %v315
    %422 = vmatpush1.bf16.msra.mxu0 %v314
    %423 = vmatprep.subr.bf16.mxu0 %v319
    %424 = vmatpush1.bf16.msra.mxu0 %v318
    %425 = vmatprep.subr.bf16.mxu0 %v323
    %426 = vmatpush1.bf16.msra.mxu0 %v322
    %427 = vmatprep.subr.bf16.mxu0 %v327
    %428 = vmatpush1.bf16.msra.mxu0 %v326
    %429 = vmatprep.subr.bf16.mxu0 0
    %430 = vmatpush1.bf16.msra.mxu0 0
    %431 = vmatprep.subr.bf16.mxu0 0
    %432 = vmatpush1.bf16.msra.mxu0 0
    %433 = vmatprep.subr.bf16.mxu0 0
    %434 = vmatpush1.bf16.msra.mxu0 0
    %435 = vmatprep.subr.bf16.mxu0 0
    %436 = vmatpush1.bf16.msra.mxu0 0
    %437 = vmatprep.subr.bf16.mxu0 0
    %438 = vmatpush1.bf16.msra.mxu0 0
    %439 = vmatprep.subr.bf16.mxu0 0
    %440 = vmatpush1.bf16.msra.mxu0 0
    %441 = vmatprep.subr.bf16.mxu0 0
    %442 = vmatpush1.bf16.msra.mxu0 0
    %443 = vmatprep.subr.bf16.mxu0 0
    %444 = vmatpush1.bf16.msra.mxu0 0
    %445 = vmatprep.mubr.bf16.mxu0 0
    %446 = vmatmul.mubr.bf16.gmra.mrb[0].mxu0 %v144
    %v447 = vpop.f32.mrb[0].mxu0
    %v448 = vadd.f32 %v191, %v447
    %v449 = vpop.f32.mrb[0].mxu0
    %v450 = vadd.f32 %v195, %v449
    %v451 = vpop.f32.mrb[0].mxu0
    %v452 = vadd.f32 %v191, %v451
    %v453 = vpop.f32.mrb[0].mxu0
    %v454 = vadd.f32 %v195, %v453
    %455 = vmatprep.mubr.bf16.mxu0 0
    %456 = vmatmul.mubr.bf16.gmra.mrb[0].mxu0 %v145
    %v457 = vpop.f32.mrb[0].mxu0
    %v458 = vadd.f32 %v191, %v457
    %v459 = vpop.f32.mrb[0].mxu0
    %v460 = vadd.f32 %v195, %v459
    %v461 = vpop.f32.mrb[0].mxu0
    %v462 = vadd.f32 %v191, %v461
    %v463 = vpop.f32.mrb[0].mxu0
    %v464 = vadd.f32 %v195, %v463
    %465 = vdwg.mxu0
    %v466 = vmul.f32 %v395, %v395
    %v467 = vmul.f32 %v397, %v397
    %v468 = vmul.f32 %v448, %v448
    %v469 = vmul.f32 %v450, %v450
    %v470 = vmul.f32 %v399, %v399
    %v471 = vmul.f32 %v401, %v401
    %v472 = vmul.f32 %v452, %v452
    %v473 = vmul.f32 %v454, %v454
    %v474 = vmul.f32 %v405, %v405
    %v475 = vmul.f32 %v407, %v407
    %v476 = vmul.f32 %v458, %v458
    %v477 = vmul.f32 %v460, %v460
    %v478 = vmul.f32 %v409, %v409
    %v479 = vmul.f32 %v411, %v411
    %v480 = vmul.f32 %v462, %v462
    %v481 = vmul.f32 %v464, %v464
    %v482 = vmul.f32 %v395, %v466
    %v483 = vmul.f32 %v397, %v467
    %v484 = vmul.f32 %v448, %v468
    %v485 = vmul.f32 %v450, %v469
    %v486 = vmul.f32 %v399, %v470
    %v487 = vmul.f32 %v401, %v471
    %v488 = vmul.f32 %v452, %v472
    %v489 = vmul.f32 %v454, %v473
    %v490 = vmul.f32 %v405, %v474
    %v491 = vmul.f32 %v407, %v475
    %v492 = vmul.f32 %v458, %v476
    %v493 = vmul.f32 %v460, %v477
    %v494 = vmul.f32 %v409, %v478
    %v495 = vmul.f32 %v411, %v479
    %v496 = vmul.f32 %v462, %v480
    %v497 = vmul.f32 %v464, %v481
    %v498 = vmul.f32 %v482, 0.044715
    %v499 = vmul.f32 %v483, 0.044715
    %v500 = vmul.f32 %v484, 0.044715
    %v501 = vmul.f32 %v485, 0.044715
    %v502 = vmul.f32 %v486, 0.044715
    %v503 = vmul.f32 %v487, 0.044715
    %v504 = vmul.f32 %v488, 0.044715
    %v505 = vmul.f32 %v489, 0.044715
    %v506 = vmul.f32 %v490, 0.044715
    %v507 = vmul.f32 %v491, 0.044715
    %v508 = vmul.f32 %v492, 0.044715
    %v509 = vmul.f32 %v493, 0.044715
    %v510 = vmul.f32 %v494, 0.044715
    %v511 = vmul.f32 %v495, 0.044715
    %v512 = vmul.f32 %v496, 0.044715
    %v513 = vmul.f32 %v497, 0.044715
    %v514 = vadd.f32 %v395, %v498
    %v515 = vadd.f32 %v397, %v499
    %v516 = vadd.f32 %v448, %v500
    %v517 = vadd.f32 %v450, %v501
    %v518 = vadd.f32 %v399, %v502
    %v519 = vadd.f32 %v401, %v503
    %v520 = vadd.f32 %v452, %v504
    %v521 = vadd.f32 %v454, %v505
    %v522 = vadd.f32 %v405, %v506
    %v523 = vadd.f32 %v407, %v507
    %v524 = vadd.f32 %v458, %v508
    %v525 = vadd.f32 %v460, %v509
    %v526 = vadd.f32 %v409, %v510
    %v527 = vadd.f32 %v411, %v511
    %v528 = vadd.f32 %v462, %v512
    %v529 = vadd.f32 %v464, %v513
    %v530 = vmul.f32 %v514, 0.7978846
    %v531 = vmul.f32 %v515, 0.7978846
    %v532 = vmul.f32 %v516, 0.7978846
    %v533 = vmul.f32 %v517, 0.7978846
    %v534 = vmul.f32 %v518, 0.7978846
    %v535 = vmul.f32 %v519, 0.7978846
    %v536 = vmul.f32 %v520, 0.7978846
    %v537 = vmul.f32 %v521, 0.7978846
    %v538 = vmul.f32 %v522, 0.7978846
    %v539 = vmul.f32 %v523, 0.7978846
    %v540 = vmul.f32 %v524, 0.7978846
    %v541 = vmul.f32 %v525, 0.7978846
    %v542 = vmul.f32 %v526, 0.7978846
    %v543 = vmul.f32 %v527, 0.7978846
    %v544 = vmul.f32 %v528, 0.7978846
    %v545 = vmul.f32 %v529, 0.7978846
    %v546 = vtanh.pop %v530
    %v547 = vtanh.pop %v531
    %v548 = vtanh.pop %v532
    %v549 = vtanh.pop %v533
    %v550 = vtanh.pop %v534
    %v551 = vtanh.pop %v535
    %v552 = vtanh.pop %v536
    %v553 = vtanh.pop %v537
    %v554 = vtanh.pop %v538
    %v555 = vtanh.pop %v539
    %v556 = vtanh.pop %v540
    %v557 = vtanh.pop %v541
    %v558 = vtanh.pop %v542
    %v559 = vtanh.pop %v543
    %v560 = vtanh.pop %v544
    %v561 = vtanh.pop %v545
    %v562 = vadd.f32 %v546, 1.0
    %v563 = vadd.f32 %v547, 1.0
    %v564 = vadd.f32 %v548, 1.0
    %v565 = vadd.f32 %v549, 1.0
    %v566 = vadd.f32 %v550, 1.0
    %v567 = vadd.f32 %v551, 1.0
    %v568 = vadd.f32 %v552, 1.0
    %v569 = vadd.f32 %v553, 1.0
    %v570 = vadd.f32 %v554, 1.0
    %v571 = vadd.f32 %v555, 1.0
    %v572 = vadd.f32 %v556, 1.0
    %v573 = vadd.f32 %v557, 1.0
    %v574 = vadd.f32 %v558, 1.0
    %v575 = vadd.f32 %v559, 1.0
    %v576 = vadd.f32 %v560, 1.0
    %v577 = vadd.f32 %v561, 1.0
    %v578 = vmul.f32 %v562, 0.5
    %v579 = vmul.f32 %v563, 0.5
    %v580 = vmul.f32 %v564, 0.5
    %v581 = vmul.f32 %v565, 0.5
    %v582 = vmul.f32 %v566, 0.5
    %v583 = vmul.f32 %v567, 0.5
    %v584 = vmul.f32 %v568, 0.5
    %v585 = vmul.f32 %v569, 0.5
    %v586 = vmul.f32 %v570, 0.5
    %v587 = vmul.f32 %v571, 0.5
    %v588 = vmul.f32 %v572, 0.5
    %v589 = vmul.f32 %v573, 0.5
    %v590 = vmul.f32 %v574, 0.5
    %v591 = vmul.f32 %v575, 0.5
    %v592 = vmul.f32 %v576, 0.5
    %v593 = vmul.f32 %v577, 0.5
    %v594 = vmul.f32 %v395, %v578
    %v595 = vmul.f32 %v397, %v579
    %v596 = vmul.f32 %v448, %v580
    %v597 = vmul.f32 %v450, %v581
    %v598 = vmul.f32 %v399, %v582
    %v599 = vmul.f32 %v401, %v583
    %v600 = vmul.f32 %v452, %v584
    %v601 = vmul.f32 %v454, %v585
    %v602 = vmul.f32 %v405, %v586
    %v603 = vmul.f32 %v407, %v587
    %v604 = vmul.f32 %v458, %v588
    %v605 = vmul.f32 %v460, %v589
    %v606 = vmul.f32 %v409, %v590
    %v607 = vmul.f32 %v411, %v591
    %v608 = vmul.f32 %v462, %v592
    %v609 = vmul.f32 %v464, %v593
    %v610 = vpack.c.bf16 %v598, %v594
    %v611 = vpack.c.bf16 %v599, %v595
    %v612 = vpack.c.bf16 %v600, %v596
    %v613 = vpack.c.bf16 %v601, %v597
    %v614 = vpack.c.bf16 %v606, %v602
    %v615 = vpack.c.bf16 %v607, %v603
    %v616 = vpack.c.bf16 %v608, %v604
    %v617 = vpack.c.bf16 %v609, %v605
    %v618 = vld [vmem:[#allocation7] sm:$0xf]
    %v619 = vld [vmem:[#allocation7 + $0x4] sm:$0xf]
    %v620 = vld [vmem:[#allocation7 + $0x8] sm:$0xf]
    %v621 = vld [vmem:[#allocation7 + $0xc] sm:$0xf]
    %v622 = vld [vmem:[#allocation7 + $0x10] sm:$0xf]
    %v623 = vld [vmem:[#allocation7 + $0x14] sm:$0xf]
    %v624 = vld [vmem:[#allocation7 + $0x18] sm:$0xf]
    %v625 = vld [vmem:[#allocation7 + $0x1c] sm:$0xf]
    %v626 = vld [vmem:[#allocation7 + $0x20] sm:$0xf]
    %v627 = vld [vmem:[#allocation7 + $0x24] sm:$0xf]
    %v628 = vld [vmem:[#allocation7 + $0x28] sm:$0xf]
    %v629 = vld [vmem:[#allocation7 + $0x2c] sm:$0xf]
    %v630 = vld [vmem:[#allocation7 + $0x30] sm:$0xf]
    %v631 = vld [vmem:[#allocation7 + $0x34] sm:$0xf]
    %v632 = vld [vmem:[#allocation7 + $0x38] sm:$0xf]
    %v633 = vld [vmem:[#allocation7 + $0x3c] sm:$0xf]
    %v634 = vld [vmem:[#allocation7 + $0x40] sm:$0xf]
    %v635 = vld [vmem:[#allocation7 + $0x44] sm:$0xf]
    %v636 = vld [vmem:[#allocation7 + $0x48] sm:$0xf]
    %v637 = vld [vmem:[#allocation7 + $0x4c] sm:$0xf]
    %v638 = vld [vmem:[#allocation7 + $0x50] sm:$0xf]
    %v639 = vld [vmem:[#allocation7 + $0x54] sm:$0xf]
    %v640 = vld [vmem:[#allocation7 + $0x58] sm:$0xf]
    %v641 = vld [vmem:[#allocation7 + $0x5c] sm:$0xf]
    %v642 = vld [vmem:[#allocation7 + $0x60] sm:$0xf]
    %v643 = vld [vmem:[#allocation7 + $0x64] sm:$0xf]
    %v644 = vld [vmem:[#allocation7 + $0x68] sm:$0xf]
    %v645 = vld [vmem:[#allocation7 + $0x6c] sm:$0xf]
    %v646 = vld [vmem:[#allocation7 + $0x70] sm:$0xf]
    %v647 = vld [vmem:[#allocation7 + $0x74] sm:$0xf]
    %v648 = vld [vmem:[#allocation7 + $0x78] sm:$0xf]
    %v649 = vld [vmem:[#allocation7 + $0x7c] sm:$0xf]
    %v650 = vld [vmem:[#allocation7 + $0x80] sm:$0xf]
    %v651 = vld [vmem:[#allocation7 + $0x84] sm:$0xf]
    %v652 = vld [vmem:[#allocation7 + $0x88] sm:$0xf]
    %v653 = vld [vmem:[#allocation7 + $0x8c] sm:$0xf]
    %v654 = vld [vmem:[#allocation7 + $0x90] sm:$0xf]
    %v655 = vld [vmem:[#allocation7 + $0x94] sm:$0xf]
    %v656 = vld [vmem:[#allocation7 + $0x98] sm:$0xf]
    %v657 = vld [vmem:[#allocation7 + $0x9c] sm:$0xf]
    %v658 = vld [vmem:[#allocation7 + $0xa0] sm:$0xf]
    %v659 = vld [vmem:[#allocation7 + $0xa4] sm:$0xf]
    %v660 = vld [vmem:[#allocation7 + $0xa8] sm:$0xf]
    %v661 = vld [vmem:[#allocation7 + $0xac] sm:$0xf]
    %v662 = vld [vmem:[#allocation7 + $0xb0] sm:$0xf]
    %v663 = vld [vmem:[#allocation7 + $0xb4] sm:$0xf]
    %v664 = vld [vmem:[#allocation7 + $0xb8] sm:$0xf]
    %v665 = vld [vmem:[#allocation7 + $0xbc] sm:$0xf]
    %v666 = vld [vmem:[#allocation7 + $0xc0] sm:$0xf]
    %v667 = vld [vmem:[#allocation7 + $0xc4] sm:$0xf]
    %v668 = vld [vmem:[#allocation7 + $0xc8] sm:$0xf]
    %v669 = vld [vmem:[#allocation7 + $0xcc] sm:$0xf]
    %v670 = vld [vmem:[#allocation7 + $0xd0] sm:$0xf]
    %v671 = vld [vmem:[#allocation7 + $0xd4] sm:$0xf]
    %v672 = vld [vmem:[#allocation7 + $0xd8] sm:$0xf]
    %v673 = vld [vmem:[#allocation7 + $0xdc] sm:$0xf]
    %v674 = vld [vmem:[#allocation7 + $0xe0] sm:$0xf]
    %v675 = vld [vmem:[#allocation7 + $0xe4] sm:$0xf]
    %v676 = vld [vmem:[#allocation7 + $0xe8] sm:$0xf]
    %v677 = vld [vmem:[#allocation7 + $0xec] sm:$0xf]
    %v678 = vld [vmem:[#allocation7 + $0xf0] sm:$0xf]
    %v679 = vld [vmem:[#allocation7 + $0xf4] sm:$0xf]
    %v680 = vld [vmem:[#allocation7 + $0xf8] sm:$0xf]
    %v681 = vld [vmem:[#allocation7 + $0xfc] sm:$0xf]
    %v682 = vld [vmem:[%s6] sm:$0x1]
    %v684 = vlaneseq
    %v685 = vshrl.u32 %v684, 7
    %v686 = vsub.s32 0, %v685
    %v687 = vrot.slane %v682, %v686
    %v753 = vunpack.c.l.b16 %v618
    %v754 = vunpack.c.l.b16 %v619
    %v755 = vunpack.c.l.b16 %v620
    %v756 = vunpack.c.l.b16 %v621
    %v757 = vunpack.c.l.b16 %v622
    %v758 = vunpack.c.l.b16 %v623
    %v759 = vunpack.c.l.b16 %v624
    %v760 = vunpack.c.l.b16 %v625
    %v761 = vunpack.c.l.b16 %v626
    %v762 = vunpack.c.l.b16 %v627
    %v763 = vunpack.c.l.b16 %v628
    %v764 = vunpack.c.l.b16 %v629
    %v765 = vunpack.c.l.b16 %v630
    %v766 = vunpack.c.l.b16 %v631
    %v767 = vunpack.c.l.b16 %v632
    %v768 = vunpack.c.l.b16 %v633
    %v769 = vunpack.c.l.b16 %v634
    %v770 = vunpack.c.l.b16 %v635
    %v771 = vunpack.c.l.b16 %v636
    %v772 = vunpack.c.l.b16 %v637
    %v773 = vunpack.c.l.b16 %v638
    %v774 = vunpack.c.l.b16 %v639
    %v775 = vunpack.c.l.b16 %v640
    %v776 = vunpack.c.l.b16 %v641
    %v777 = vunpack.c.l.b16 %v642
    %v778 = vunpack.c.l.b16 %v643
    %v779 = vunpack.c.l.b16 %v644
    %v780 = vunpack.c.l.b16 %v645
    %v781 = vunpack.c.l.b16 %v646
    %v782 = vunpack.c.l.b16 %v647
    %v783 = vunpack.c.l.b16 %v648
    %v784 = vunpack.c.l.b16 %v649
    %v785 = vunpack.c.l.b16 %v650
    %v786 = vunpack.c.l.b16 %v651
    %v787 = vunpack.c.l.b16 %v652
    %v788 = vunpack.c.l.b16 %v653
    %v789 = vunpack.c.l.b16 %v654
    %v790 = vunpack.c.l.b16 %v655
    %v791 = vunpack.c.l.b16 %v656
    %v792 = vunpack.c.l.b16 %v657
    %v793 = vunpack.c.l.b16 %v658
    %v794 = vunpack.c.l.b16 %v659
    %v795 = vunpack.c.l.b16 %v660
    %v796 = vunpack.c.l.b16 %v661
    %v797 = vunpack.c.l.b16 %v662
    %v798 = vunpack.c.l.b16 %v663
    %v799 = vunpack.c.l.b16 %v664
    %v800 = vunpack.c.l.b16 %v665
    %v801 = vunpack.c.l.b16 %v666
    %v802 = vunpack.c.l.b16 %v667
    %v803 = vunpack.c.l.b16 %v668
    %v804 = vunpack.c.l.b16 %v669
    %v805 = vunpack.c.l.b16 %v670
    %v806 = vunpack.c.l.b16 %v671
    %v807 = vunpack.c.l.b16 %v672
    %v808 = vunpack.c.l.b16 %v673
    %v809 = vunpack.c.l.b16 %v674
    %v810 = vunpack.c.l.b16 %v675
    %v811 = vunpack.c.l.b16 %v676
    %v812 = vunpack.c.l.b16 %v677
    %v813 = vunpack.c.l.b16 %v678
    %v814 = vunpack.c.l.b16 %v679
    %v815 = vunpack.c.l.b16 %v680
    %v816 = vunpack.c.l.b16 %v681
    %v817 = vpack.c.b16 %v754, %v753
    %v818 = vpack.c.b16 %v756, %v755
    %v819 = vpack.c.b16 %v758, %v757
    %v820 = vpack.c.b16 %v760, %v759
    %v821 = vpack.c.b16 %v762, %v761
    %v822 = vpack.c.b16 %v764, %v763
    %v823 = vpack.c.b16 %v766, %v765
    %v824 = vpack.c.b16 %v768, %v767
    %v825 = vpack.c.b16 %v770, %v769
    %v826 = vpack.c.b16 %v772, %v771
    %v827 = vpack.c.b16 %v774, %v773
    %v828 = vpack.c.b16 %v776, %v775
    %v829 = vpack.c.b16 %v778, %v777
    %v830 = vpack.c.b16 %v780, %v779
    %v831 = vpack.c.b16 %v782, %v781
    %v832 = vpack.c.b16 %v784, %v783
    %v833 = vpack.c.b16 %v786, %v785
    %v834 = vpack.c.b16 %v788, %v787
    %v835 = vpack.c.b16 %v790, %v789
    %v836 = vpack.c.b16 %v792, %v791
    %v837 = vpack.c.b16 %v794, %v793
    %v838 = vpack.c.b16 %v796, %v795
    %v839 = vpack.c.b16 %v798, %v797
    %v840 = vpack.c.b16 %v800, %v799
    %v841 = vpack.c.b16 %v802, %v801
    %v842 = vpack.c.b16 %v804, %v803
    %v843 = vpack.c.b16 %v806, %v805
    %v844 = vpack.c.b16 %v808, %v807
    %v845 = vpack.c.b16 %v810, %v809
    %v846 = vpack.c.b16 %v812, %v811
    %v847 = vpack.c.b16 %v814, %v813
    %v848 = vpack.c.b16 %v816, %v815
    %881 = vmatprep.subr.bf16.mxu0 0
    %882 = vmatpush1.bf16.msra.mxu0 %v817
    %883 = vmatprep.subr.bf16.mxu0 0
    %884 = vmatpush1.bf16.msra.mxu0 %v818
    %885 = vmatprep.subr.bf16.mxu0 0
    %886 = vmatpush1.bf16.msra.mxu0 %v819
    %887 = vmatprep.subr.bf16.mxu0 0
    %888 = vmatpush1.bf16.msra.mxu0 %v820
    %889 = vmatprep.subr.bf16.mxu0 0
    %890 = vmatpush1.bf16.msra.mxu0 %v821
    %891 = vmatprep.subr.bf16.mxu0 0
    %892 = vmatpush1.bf16.msra.mxu0 %v822
    %893 = vmatprep.subr.bf16.mxu0 0
    %894 = vmatpush1.bf16.msra.mxu0 %v823
    %895 = vmatprep.subr.bf16.mxu0 0
    %896 = vmatpush1.bf16.msra.mxu0 %v824
    %897 = vmatprep.subr.bf16.mxu0 0
    %898 = vmatpush1.bf16.msra.mxu0 %v825
    %899 = vmatprep.subr.bf16.mxu0 0
    %900 = vmatpush1.bf16.msra.mxu0 %v826
    %901 = vmatprep.subr.bf16.mxu0 0
    %902 = vmatpush1.bf16.msra.mxu0 %v827
    %903 = vmatprep.subr.bf16.mxu0 0
    %904 = vmatpush1.bf16.msra.mxu0 %v828
    %905 = vmatprep.subr.bf16.mxu0 0
    %906 = vmatpush1.bf16.msra.mxu0 %v829
    %907 = vmatprep.subr.bf16.mxu0 0
    %908 = vmatpush1.bf16.msra.mxu0 %v830
    %909 = vmatprep.subr.bf16.mxu0 0
    %910 = vmatpush1.bf16.msra.mxu0 %v831
    %911 = vmatprep.subr.bf16.mxu0 0
    %912 = vmatpush1.bf16.msra.mxu0 %v832
    %913 = vmatprep.mubr.bf16.mxu0 %v611
    %914 = vmatmul.mubr.bf16.gmra.mrb[0].mxu0 %v610
    %v915 = vpop.f32.mrb[0].mxu0
    %v916 = vadd.f32 %v687, %v915
    %v917 = vpop.f32.mrb[0].mxu0
    %v918 = vpop.f32.mrb[0].mxu0
    %v919 = vadd.f32 %v687, %v918
    %v920 = vpop.f32.mrb[0].mxu0
    %921 = vmatprep.mubr.bf16.mxu0 %v615
    %922 = vmatmul.mubr.bf16.gmra.mrb[0].mxu0 %v614
    %v923 = vpop.f32.mrb[0].mxu0
    %v924 = vadd.f32 %v687, %v923
    %v925 = vpop.f32.mrb[0].mxu0
    %v926 = vpop.f32.mrb[0].mxu0
    %v927 = vadd.f32 %v687, %v926
    %v928 = vpop.f32.mrb[0].mxu0
    %929 = vdwg.mxu0
    %930 = vmatprep.subr.bf16.mxu0 0
    %931 = vmatpush1.bf16.msra.mxu0 %v833
    %932 = vmatprep.subr.bf16.mxu0 0
    %933 = vmatpush1.bf16.msra.mxu0 %v834
    %934 = vmatprep.subr.bf16.mxu0 0
    %935 = vmatpush1.bf16.msra.mxu0 %v835
    %936 = vmatprep.subr.bf16.mxu0 0
    %937 = vmatpush1.bf16.msra.mxu0 %v836
    %938 = vmatprep.subr.bf16.mxu0 0
    %939 = vmatpush1.bf16.msra.mxu0 %v837
    %940 = vmatprep.subr.bf16.mxu0 0
    %941 = vmatpush1.bf16.msra.mxu0 %v838
    %942 = vmatprep.subr.bf16.mxu0 0
    %943 = vmatpush1.bf16.msra.mxu0 %v839
    %944 = vmatprep.subr.bf16.mxu0 0
    %945 = vmatpush1.bf16.msra.mxu0 %v840
    %946 = vmatprep.subr.bf16.mxu0 0
    %947 = vmatpush1.bf16.msra.mxu0 %v841
    %948 = vmatprep.subr.bf16.mxu0 0
    %949 = vmatpush1.bf16.msra.mxu0 %v842
    %950 = vmatprep.subr.bf16.mxu0 0
    %951 = vmatpush1.bf16.msra.mxu0 %v843
    %952 = vmatprep.subr.bf16.mxu0 0
    %953 = vmatpush1.bf16.msra.mxu0 %v844
    %954 = vmatprep.subr.bf16.mxu0 0
    %955 = vmatpush1.bf16.msra.mxu0 %v845
    %956 = vmatprep.subr.bf16.mxu0 0
    %957 = vmatpush1.bf16.msra.mxu0 %v846
    %958 = vmatprep.subr.bf16.mxu0 0
    %959 = vmatpush1.bf16.msra.mxu0 %v847
    %960 = vmatprep.subr.bf16.mxu0 0
    %961 = vmatpush1.bf16.msra.mxu0 %v848
    %962 = vmatprep.mubr.bf16.mxu0 %v613
    %963 = vmatmul.mubr.bf16.gmra.mrb[0].mxu0 %v612
    %v964 = vpop.f32.mrb[0].mxu0
    %v965 = vadd.f32 %v916, %v964
    %v966 = vpop.f32.mrb[0].mxu0
    %v967 = vpop.f32.mrb[0].mxu0
    %v968 = vadd.f32 %v919, %v967
    %v969 = vpop.f32.mrb[0].mxu0
    %970 = vmatprep.mubr.bf16.mxu0 %v617
    %971 = vmatmul.mubr.bf16.gmra.mrb[0].mxu0 %v616
    %v972 = vpop.f32.mrb[0].mxu0
    %v973 = vadd.f32 %v924, %v972
    %v974 = vpop.f32.mrb[0].mxu0
    %v975 = vpop.f32.mrb[0].mxu0
    %v976 = vadd.f32 %v927, %v975
    %v977 = vpop.f32.mrb[0].mxu0
    %978 = vdwg.mxu0
    %v979 = vpack.c.bf16 %v968, %v965
    %v980 = vpack.c.bf16 %v976, %v973
    %v983 = vunpack.c.l.b16 %v979
    %v984 = vunpack.c.h.b16 %v979
    %v985 = vunpack.c.l.b16 %v980
    %v986 = vunpack.c.h.b16 %v980
    %v987 = vpack.c.b16 %v983, %v983
    %v988 = vpack.c.b16 %v984, %v984
    %v989 = vpack.c.b16 %v985, %v985
    %v990 = vpack.c.b16 %v986, %v986
    %995 = vst [vmem:[#allocation8] sm:$0xf] %v987
    %996 = vst [vmem:[#allocation8 + $0x4] sm:$0xf] %v988
    %997 = vst [vmem:[#allocation8 + $0x8] sm:$0xf] %v989
    %998 = vst [vmem:[#allocation8 + $0xc] sm:$0xf] %v990
    // Predicated region
    $region42: #{tpu_custom_call.1} parent=1 // pred_check
      _
    $region43: #{tpu_custom_call.1} parent=1 // pred_check_branch
      %1000 = sbr.rel (0) target = $region45
    $region44: #{tpu_custom_call.1} parent=1 // pred_region
      %s1002 = ssub.s32 256, 256
      %1003 = vsyncadd [#allocation4], %s1002
      %s1004 = sshll.u32 [#allocation8], 4
      %s1005 = int_to_ptr.vmem [resolvable:$true] %s1004
      %1010 = dma.vmem_to_hbm [thread:$0]  %s1005, 256, %s7, [#allocation4], 64, 64, 4
    $region45: #{tpu_custom_call.1} parent=1 // pred_fallthru
      _
    // Predicated region
    $region46: #{tpu_custom_call.1} parent=1 // pred_check
      _
    $region47: #{tpu_custom_call.1} parent=1 // pred_check_branch
      %1012 = sbr.rel (0) target = $region49
    $region48: #{tpu_custom_call.1} parent=1 // pred_region
      %1013 = dma.done [#allocation4], 256
    $region49: #{tpu_custom_call.1} parent=1 // pred_fallthru
      _
    %1014 = vsyncpa [#allocation3], 1
    %1015 = vsyncpa [#allocation6], 1
    %1016 = vsyncpa [#allocation4], 1

</llo_original>
